<compile_context>
chip_gen: v7x
topology: tpu7x:2x2x1
jax: 0.10.0
libtpu: 0.0.40
codegen_flags: <defaults>
</compile_context>

<pallas_src>
import math

import jax
import jax.numpy as jnp
from jax.experimental import pallas as pl
from jax.experimental.pallas import tpu as pltpu

LANE_ALIGN = 256  # multiple of v5e (128) and v6e/v7x (256) MXU N width


def dqn_mlp_kernel(xt_ref, w1_ref, b1_ref, w2_ref, b2_ref, w3_ref, b3_ref,
                   o_ref):
    """One lane-mapped batch tile of the transposed DQN MLP.

    Shapes inside the kernel (TB = batch tile on the lane axis):
      xt (F, TB), W1 (64, F), W2 (32, 64), W3 (A, 32), biases (out, 1).
    Matmul operands may be bf16 (cast in the wrapper); accumulate/bias/ReLU
    are f32 on the VPU.
    """
    xt = xt_ref[...]                                               # (F, TB)

    # Layer 1: h1^T = relu(W1 @ x^T + b1)      (64, TB)
    h1 = jnp.dot(w1_ref[...], xt, preferred_element_type=jnp.float32)
    h1 = jnp.maximum(h1 + b1_ref[...], 0.0)
    h1 = h1.astype(w2_ref.dtype)

    # Layer 2: h2^T = relu(W2 @ h1^T + b2)     (32, TB)
    h2 = jnp.dot(w2_ref[...], h1, preferred_element_type=jnp.float32)
    h2 = jnp.maximum(h2 + b2_ref[...], 0.0)
    h2 = h2.astype(w3_ref.dtype)

    # Layer 3: o^T = W3 @ h2^T + b3            (A, TB), lane-dense store
    out = jnp.dot(w3_ref[...], h2, preferred_element_type=jnp.float32)
    o_ref[...] = (out + b3_ref[...]).astype(o_ref.dtype)


def _round_up(n, m):
    return ((n + m - 1) // m) * m


def _cdiv(a, b):
    return -(-a // b)


def dqn_forward(x, params, *, tb_max=2048, compute_dtype=jnp.bfloat16):
    """DQNNet forward pass as a single batch-tiled Pallas kernel.

    x: (B, F) float32
    params: PyTorch-native layout -- w1 (64,F), b1 (64,1), w2 (32,64),
            b2 (32,1), w3 (A,32), b3 (A,1), all float32.
    compute_dtype: dtype of the MXU operands (bf16 default; f32 for exactness).
    """
    B, F = x.shape
    A = params["w3"].shape[0]

    # ---- batch tile on the lane axis: MXU-width aligned, VMEM-trivial ----
    tb_cap = max(LANE_ALIGN, (tb_max // LANE_ALIGN) * LANE_ALIGN)
    TB = min(tb_cap, _round_up(B, LANE_ALIGN))
    steps = _cdiv(B, TB)
    if steps > 1 and steps % 2 == 1:
        # v7x: prefer an even step count so both TensorCores stay busy on the
        # "parallel" axis -- but only if it doesn't cost an extra padded tile.
        new_tb = _round_up(_cdiv(B, steps + 1), LANE_ALIGN)
        if _cdiv(B, new_tb) % 2 == 0:
            TB = new_tb
    steps = _cdiv(B, TB)
    Bp = steps * TB

    # ---- wrapper-side layout & dtype prep (one fused XLA pass over x) ----
    # Transpose so batch is the lane axis, cast matmul operands once (no
    # per-grid-step casts in the kernel), pad the ragged lane tail with zeros
    # (padded columns are sliced off below, never observed).
    xt = x.T.astype(compute_dtype)
    if Bp != B:
        xt = jnp.pad(xt, ((0, 0), (0, Bp - B)))

    w1 = params["w1"].astype(compute_dtype)
    w2 = params["w2"].astype(compute_dtype)
    w3 = params["w3"].astype(compute_dtype)
    b1, b2, b3 = params["b1"], params["b2"], params["b3"]  # f32 bias/ReLU path

    def resident(arr):
        # Full-array block, constant index -> DMA'd once, VMEM-resident across
        # all grid steps (all weights + biases together are only a few KiB).
        return pl.BlockSpec(arr.shape, lambda i: (0, 0))

    in_specs = [
        pl.BlockSpec((F, TB), lambda i: (0, i)),   # x^T: lane-dense batch tile
        resident(w1), resident(b1),
        resident(w2), resident(b2),
        resident(w3), resident(b3),
    ]
    out_spec = pl.BlockSpec((A, TB), lambda i: (0, i))  # o^T: lane-dense

    itemsize = jnp.dtype(compute_dtype).itemsize
    flops = 2 * Bp * (F * 64 + 64 * 32 + 32 * A)
    bytes_accessed = (itemsize * (Bp * F + 64 * F + 32 * 64 + A * 32)
                      + 4 * (A * Bp + 64 + 32 + A))

    out_t = pl.pallas_call(
        dqn_mlp_kernel,
        out_shape=jax.ShapeDtypeStruct((A, Bp), jnp.float32),
        grid=(steps,),
        in_specs=in_specs,
        out_specs=out_spec,
        compiler_params=pltpu.CompilerParams(
            # Independent batch tiles -> sharded across both TCs on v7x.
            dimension_semantics=("parallel",)),
        cost_estimate=pl.CostEstimate(
            flops=flops, transcendentals=0, bytes_accessed=bytes_accessed),
    )(xt, w1, b1, w2, b2, w3, b3)

    # (A, Bp) -> (B, A); tiny wrapper-side transpose of the final Q-values.
    return out_t[:, :B].T


def init_params(key, n_features, n_actions):
    """Deterministic synthetic init; PyTorch-native (out,in) weight layout."""
    ks = jax.random.split(key, 6)

    def lin(kw, kb, fan_in, fan_out):
        bound = 1.0 / math.sqrt(fan_in)   # nn.Linear default U(-1/sqrt(fan_in), ...)
        w = jax.random.uniform(kw, (fan_out, fan_in), jnp.float32, -bound, bound)
        b = jax.random.uniform(kb, (fan_out, 1), jnp.float32, -bound, bound)
        return w, b

    w1, b1 = lin(ks[0], ks[1], n_features, 64)
    w2, b2 = lin(ks[2], ks[3], 64, 32)
    w3, b3 = lin(ks[4], ks[5], 32, n_actions)
    return {"w1": w1, "b1": b1, "w2": w2, "b2": b2, "w3": w3, "b3": b3}


def reference_forward(x, p):
    h1 = jnp.maximum(x @ p["w1"].T + p["b1"].T, 0.0)
    h2 = jnp.maximum(h1 @ p["w2"].T + p["b2"].T, 0.0)
    return h2 @ p["w3"].T + p["b3"].T


if __name__ == "__main__":
    key = jax.random.PRNGKey(0)
    kx, kp, kx2 = jax.random.split(key, 3)

    n_features, n_actions = 16, 4
    params = init_params(kp, n_features, n_actions)

    # Small act()-sized batch, f32 operand path: matches reference tightly.
    x_small = jax.random.normal(kx, (8, n_features), jnp.float32)
    ref_small = reference_forward(x_small, params)
    out_f32 = jax.block_until_ready(
        dqn_forward(x_small, params, compute_dtype=jnp.float32))
    assert out_f32.shape == (8, n_actions)
    assert jnp.allclose(out_f32, ref_small, atol=1e-5, rtol=1e-5)

    # Same batch, default bf16-operand fast path (f32 accumulate/bias/ReLU).
    out_bf16 = jax.block_until_ready(dqn_forward(x_small, params))
    assert out_bf16.shape == (8, n_actions)
    assert jnp.allclose(out_bf16, ref_small, atol=5e-2, rtol=5e-2)

    # Ragged replay-buffer-sized batch: multi-step grid, resident weights,
    # lane-axis padding.
    x_big = jax.random.normal(kx2, (1030, n_features), jnp.float32)
    ref_big = reference_forward(x_big, params)
    out_big = jax.block_until_ready(dqn_forward(x_big, params, tb_max=512))
    assert out_big.shape == (1030, n_actions)
    assert jnp.allclose(out_big, ref_big, atol=5e-2, rtol=5e-2)

    out_big_f32 = jax.block_until_ready(
        dqn_forward(x_big, params, tb_max=512, compute_dtype=jnp.float32))
    assert jnp.allclose(out_big_f32, ref_big, atol=1e-4, rtol=1e-4)

    print("KERNEL_OK")
</pallas_src>

<mosaic_0001>
module attributes {stable_mosaic.version = 11 : i64} {
  func.func @dqn_mlp_kernel(%arg0: i32, %arg1: memref<16x256xf32, #tpu.memory_space<vmem>>, %arg2: memref<64x16xf32, #tpu.memory_space<vmem>>, %arg3: memref<64x1xf32, #tpu.memory_space<vmem>>, %arg4: memref<32x64xf32, #tpu.memory_space<vmem>>, %arg5: memref<32x1xf32, #tpu.memory_space<vmem>>, %arg6: memref<4x32xf32, #tpu.memory_space<vmem>>, %arg7: memref<4x1xf32, #tpu.memory_space<vmem>>, %arg8: memref<4x256xf32, #tpu.memory_space<vmem>>) attributes {dimension_semantics = [#tpu.dimension_semantics<parallel>], iteration_bounds = array<i64: 1>, scalar_prefetch = 0 : i64, scratch_operands = 0 : i64, tpu.core_type = #tpu.core_type<tc>, window_params = [{transform_indices = @transform_0, window_bounds = array<i64: 16, 256>}, {pipeline_mode = #tpu.pipeline_mode<synchronous>, transform_indices = @transform_1, window_bounds = array<i64: 64, 16>}, {pipeline_mode = #tpu.pipeline_mode<synchronous>, transform_indices = @transform_2, window_bounds = array<i64: 64, 1>}, {pipeline_mode = #tpu.pipeline_mode<synchronous>, transform_indices = @transform_3, window_bounds = array<i64: 32, 64>}, {pipeline_mode = #tpu.pipeline_mode<synchronous>, transform_indices = @transform_4, window_bounds = array<i64: 32, 1>}, {pipeline_mode = #tpu.pipeline_mode<synchronous>, transform_indices = @transform_5, window_bounds = array<i64: 4, 32>}, {pipeline_mode = #tpu.pipeline_mode<synchronous>, transform_indices = @transform_6, window_bounds = array<i64: 4, 1>}, {transform_indices = @transform_7, window_bounds = array<i64: 4, 256>}]} {
    %c0 = arith.constant 0 : index
    %c0_0 = arith.constant 0 : index
    %0 = vector.load %arg1[%c0, %c0_0] : memref<16x256xf32, #tpu.memory_space<vmem>>, vector<16x256xf32>
    %c0_1 = arith.constant 0 : index
    %c0_2 = arith.constant 0 : index
    %1 = vector.load %arg2[%c0_1, %c0_2] : memref<64x16xf32, #tpu.memory_space<vmem>>, vector<64x16xf32>
    %cst = arith.constant dense<0.000000e+00> : vector<64x256xf32>
    %2 = tpu.matmul %1, %0, %cst {dimension_numbers = #tpu.dot_dimension_numbers<[1], [0], [0], [1], [0, 0, 1, 1], [], []>} : vector<64x16xf32>, vector<16x256xf32>, vector<64x256xf32> -> vector<64x256xf32>
    %c0_3 = arith.constant 0 : index
    %c0_4 = arith.constant 0 : index
    %3 = vector.load %arg3[%c0_3, %c0_4] : memref<64x1xf32, #tpu.memory_space<vmem>>, vector<64x1xf32>
    %4 = vector.broadcast %3 : vector<64x1xf32> to vector<64x256xf32>
    %5 = arith.addf %2, %4 : vector<64x256xf32>
    %cst_5 = arith.constant 0.000000e+00 : f32
    %6 = vector.broadcast %cst_5 : f32 to vector<64x256xf32>
    %7 = arith.maximumf %5, %6 : vector<64x256xf32>
    %c0_6 = arith.constant 0 : index
    %c0_7 = arith.constant 0 : index
    %8 = vector.load %arg4[%c0_6, %c0_7] : memref<32x64xf32, #tpu.memory_space<vmem>>, vector<32x64xf32>
    %cst_8 = arith.constant dense<0.000000e+00> : vector<32x256xf32>
    %9 = tpu.matmul %8, %7, %cst_8 {dimension_numbers = #tpu.dot_dimension_numbers<[1], [0], [0], [1], [0, 0, 1, 1], [], []>} : vector<32x64xf32>, vector<64x256xf32>, vector<32x256xf32> -> vector<32x256xf32>
    %c0_9 = arith.constant 0 : index
    %c0_10 = arith.constant 0 : index
    %10 = vector.load %arg5[%c0_9, %c0_10] : memref<32x1xf32, #tpu.memory_space<vmem>>, vector<32x1xf32>
    %11 = vector.broadcast %10 : vector<32x1xf32> to vector<32x256xf32>
    %12 = arith.addf %9, %11 : vector<32x256xf32>
    %cst_11 = arith.constant 0.000000e+00 : f32
    %13 = vector.broadcast %cst_11 : f32 to vector<32x256xf32>
    %14 = arith.maximumf %12, %13 : vector<32x256xf32>
    %c0_12 = arith.constant 0 : index
    %c0_13 = arith.constant 0 : index
    %15 = vector.load %arg6[%c0_12, %c0_13] : memref<4x32xf32, #tpu.memory_space<vmem>>, vector<4x32xf32>
    %cst_14 = arith.constant dense<0.000000e+00> : vector<4x256xf32>
    %16 = tpu.matmul %15, %14, %cst_14 {dimension_numbers = #tpu.dot_dimension_numbers<[1], [0], [0], [1], [0, 0, 1, 1], [], []>} : vector<4x32xf32>, vector<32x256xf32>, vector<4x256xf32> -> vector<4x256xf32>
    %c0_15 = arith.constant 0 : index
    %c0_16 = arith.constant 0 : index
    %17 = vector.load %arg7[%c0_15, %c0_16] : memref<4x1xf32, #tpu.memory_space<vmem>>, vector<4x1xf32>
    %18 = vector.broadcast %17 : vector<4x1xf32> to vector<4x256xf32>
    %19 = arith.addf %16, %18 : vector<4x256xf32>
    %c0_17 = arith.constant 0 : index
    %c0_18 = arith.constant 0 : index
    %20 = vector.load %arg8[%c0_17, %c0_18] : memref<4x256xf32, #tpu.memory_space<vmem>>, vector<4x256xf32>
    tpu.vector_store %arg8[%c0_17, %c0_18], %19 {strides = array<i32>} : memref<4x256xf32, #tpu.memory_space<vmem>>, vector<4x256xf32>,
    return
  }
  func.func @transform_0(%arg0: i32) -> (i32, i32) {
    %c0_i32 = arith.constant 0 : i32
    %c0_i32_0 = arith.constant 0 : i32
    return %c0_i32, %arg0 : i32, i32
  }
  func.func @transform_1(%arg0: i32) -> (i32, i32) {
    %c0_i32 = arith.constant 0 : i32
    %c0_i32_0 = arith.constant 0 : i32
    %c0_i32_1 = arith.constant 0 : i32
    return %c0_i32, %c0_i32_0 : i32, i32
  }
  func.func @transform_2(%arg0: i32) -> (i32, i32) {
    %c0_i32 = arith.constant 0 : i32
    %c0_i32_0 = arith.constant 0 : i32
    %c0_i32_1 = arith.constant 0 : i32
    return %c0_i32, %c0_i32_0 : i32, i32
  }
  func.func @transform_3(%arg0: i32) -> (i32, i32) {
    %c0_i32 = arith.constant 0 : i32
    %c0_i32_0 = arith.constant 0 : i32
    %c0_i32_1 = arith.constant 0 : i32
    return %c0_i32, %c0_i32_0 : i32, i32
  }
  func.func @transform_4(%arg0: i32) -> (i32, i32) {
    %c0_i32 = arith.constant 0 : i32
    %c0_i32_0 = arith.constant 0 : i32
    %c0_i32_1 = arith.constant 0 : i32
    return %c0_i32, %c0_i32_0 : i32, i32
  }
  func.func @transform_5(%arg0: i32) -> (i32, i32) {
    %c0_i32 = arith.constant 0 : i32
    %c0_i32_0 = arith.constant 0 : i32
    %c0_i32_1 = arith.constant 0 : i32
    return %c0_i32, %c0_i32_0 : i32, i32
  }
  func.func @transform_6(%arg0: i32) -> (i32, i32) {
    %c0_i32 = arith.constant 0 : i32
    %c0_i32_0 = arith.constant 0 : i32
    %c0_i32_1 = arith.constant 0 : i32
    return %c0_i32, %c0_i32_0 : i32, i32
  }
  func.func @transform_7(%arg0: i32) -> (i32, i32) {
    %c0_i32 = arith.constant 0 : i32
    %c0_i32_0 = arith.constant 0 : i32
    return %c0_i32, %arg0 : i32, i32
  }
}

</mosaic_0001>

<llo_original>
// kernel: tpu_custom_call.1
$region0: #{tpu_custom_call.1}
  #allocation0 [shape = 'u32[]', space=smem, size = 0x4, offset = 0x4, fixed_abs, tag = 'smem constant byte address 0x4 - core index']
  #allocation1 [shape = 'u32[144,128]{1,0:T(1,128)}', space=vmem, size = 0x12000, scoped, tag = 'internal scratch']
  %s0 = inlined_call_operand.vmem [shape: f32[16,256], index: 0, kind: input, shape index: {}]
  %s1 = inlined_call_operand.vmem [shape: f32[64,16], index: 1, kind: input, shape index: {}]
  %s2 = inlined_call_operand.vmem [shape: f32[64,1], index: 2, kind: input, shape index: {}]
  %s3 = inlined_call_operand.vmem [shape: f32[32,64], index: 3, kind: input, shape index: {}]
  %s4 = inlined_call_operand.vmem [shape: f32[32,1], index: 4, kind: input, shape index: {}]
  %s5 = inlined_call_operand.vmem [shape: f32[4,32], index: 5, kind: input, shape index: {}]
  %s6 = inlined_call_operand.vmem [shape: f32[4,1], index: 6, kind: input, shape index: {}]
  %s7 = inlined_call_operand.hbm [shape: f32[4,256], index: 7, kind: output, shape index: {}]
  %s8 = sld [smem:[#allocation0]]
  $region38: #{tpu_custom_call.1} parent=0
    _
  %s10 = ssub.s32 1, %s8
  %s11 = scalar_select 0, %s10, %s8
  $region1: #{tpu_custom_call.1} parent=0
    #allocation2 [shape = 'u8[4096]{0}', space=vmem, size = 0x1000, scoped, tag = 'output window, operand 0, single buffered']
    #allocation3 [shape = 's32[1]{0}', space=sflag, size = 0x4, scoped, tag = 'scoped memory for tpu_custom_call.1']
    %12 = vsyncpa [#allocation3], 0
    // Predicated region
    $region2: #{tpu_custom_call.1} parent=1 // pred_check
      _
    $region3: #{tpu_custom_call.1} parent=1 // pred_check_branch
      %14 = sbr.rel (0) target = $region5
    $region4: #{tpu_custom_call.1} parent=1 // pred_region
      _
    $region5: #{tpu_custom_call.1} parent=1 // pred_fallthru
      _
    // Predicated region
    $region6: #{tpu_custom_call.1} parent=1 // pred_check
      _
    $region7: #{tpu_custom_call.1} parent=1 // pred_check_branch
      %16 = sbr.rel (0) target = $region9
    $region8: #{tpu_custom_call.1} parent=1 // pred_region
      _
    $region9: #{tpu_custom_call.1} parent=1 // pred_fallthru
      _
    // Predicated region
    $region10: #{tpu_custom_call.1} parent=1 // pred_check
      _
    $region11: #{tpu_custom_call.1} parent=1 // pred_check_branch
      %18 = sbr.rel (0) target = $region13
    $region12: #{tpu_custom_call.1} parent=1 // pred_region
      _
    $region13: #{tpu_custom_call.1} parent=1 // pred_fallthru
      _
    // Predicated region
    $region14: #{tpu_custom_call.1} parent=1 // pred_check
      _
    $region15: #{tpu_custom_call.1} parent=1 // pred_check_branch
      %20 = sbr.rel (0) target = $region17
    $region16: #{tpu_custom_call.1} parent=1 // pred_region
      _
    $region17: #{tpu_custom_call.1} parent=1 // pred_fallthru
      _
    // Predicated region
    $region18: #{tpu_custom_call.1} parent=1 // pred_check
      _
    $region19: #{tpu_custom_call.1} parent=1 // pred_check_branch
      %22 = sbr.rel (0) target = $region21
    $region20: #{tpu_custom_call.1} parent=1 // pred_region
      _
    $region21: #{tpu_custom_call.1} parent=1 // pred_fallthru
      _
    // Predicated region
    $region22: #{tpu_custom_call.1} parent=1 // pred_check
      _
    $region23: #{tpu_custom_call.1} parent=1 // pred_check_branch
      %24 = sbr.rel (0) target = $region25
    $region24: #{tpu_custom_call.1} parent=1 // pred_region
      _
    $region25: #{tpu_custom_call.1} parent=1 // pred_fallthru
      _
    // Predicated region
    $region26: #{tpu_custom_call.1} parent=1 // pred_check
      _
    $region27: #{tpu_custom_call.1} parent=1 // pred_check_branch
      %26 = sbr.rel (0) target = $region29
    $region28: #{tpu_custom_call.1} parent=1 // pred_region
      _
    $region29: #{tpu_custom_call.1} parent=1 // pred_fallthru
      _
    %v27 = vld [vmem:[%s0] sm:$0xff]
    %v28 = vld [vmem:[%s0 + $0x8] sm:$0xff]
    %v29 = vld [vmem:[%s0 + $0x10] sm:$0xff]
    %v30 = vld [vmem:[%s0 + $0x18] sm:$0xff]
    %v31 = vld [vmem:[%s1] sm:$0xff]
    %v32 = vld [vmem:[%s1 + $0x8] sm:$0xff]
    %v33 = vld [vmem:[%s1 + $0x10] sm:$0xff]
    %v34 = vld [vmem:[%s1 + $0x18] sm:$0xff]
    %v35 = vld [vmem:[%s1 + $0x20] sm:$0xff]
    %v36 = vld [vmem:[%s1 + $0x28] sm:$0xff]
    %v37 = vld [vmem:[%s1 + $0x30] sm:$0xff]
    %v38 = vld [vmem:[%s1 + $0x38] sm:$0xff]
    %v39 = vld [vmem:[%s2] sm:$0xff]
    %v40 = vld [vmem:[%s2 + $0x8] sm:$0xff]
    %v41 = vld [vmem:[%s2 + $0x10] sm:$0xff]
    %v42 = vld [vmem:[%s2 + $0x18] sm:$0xff]
    %v43 = vld [vmem:[%s2 + $0x20] sm:$0xff]
    %v44 = vld [vmem:[%s2 + $0x28] sm:$0xff]
    %v45 = vld [vmem:[%s2 + $0x30] sm:$0xff]
    %v46 = vld [vmem:[%s2 + $0x38] sm:$0xff]
    %48 = vset.pattern.permute.xlu0 0
    %49 = vperm.xlu0 %48, %v39
    %v50 = vpop.permute.xlu0 %49
    %53 = vset.pattern.permute.xlu0 0
    %54 = vperm.xlu0 %53, %v40
    %v55 = vpop.permute.xlu0 %54
    %58 = vset.pattern.permute.xlu0 0
    %59 = vperm.xlu0 %58, %v41
    %v60 = vpop.permute.xlu0 %59
    %63 = vset.pattern.permute.xlu0 0
    %64 = vperm.xlu0 %63, %v42
    %v65 = vpop.permute.xlu0 %64
    %68 = vset.pattern.permute.xlu0 0
    %69 = vperm.xlu0 %68, %v43
    %v70 = vpop.permute.xlu0 %69
    %73 = vset.pattern.permute.xlu0 0
    %74 = vperm.xlu0 %73, %v44
    %v75 = vpop.permute.xlu0 %74
    %78 = vset.pattern.permute.xlu0 0
    %79 = vperm.xlu0 %78, %v45
    %v80 = vpop.permute.xlu0 %79
    %83 = vset.pattern.permute.xlu0 0
    %84 = vperm.xlu0 %83, %v46
    %v85 = vpop.permute.xlu0 %84
    %vm87 = vcmask 130048
    %v89 = vsel %vm87, %v31, 0
    %v92 = vsel %vm87, %v32, 0
    %v95 = vsel %vm87, %v33, 0
    %v98 = vsel %vm87, %v34, 0
    %v101 = vsel %vm87, %v35, 0
    %v104 = vsel %vm87, %v36, 0
    %v107 = vsel %vm87, %v37, 0
    %v110 = vsel %vm87, %v38, 0
    %112 = vmatprep.subr.mxu0 %v28
    %113 = vmatpush1.msra.mxu0 %v27
    %114 = vmatprep.subr.mxu0 %v30
    %115 = vmatpush1.msra.mxu0 %v29
    %116 = vmatprep.subr.mxu0 0.0
    %117 = vmatpush1.msra.mxu0 0.0
    %118 = vmatprep.subr.mxu0 0.0
    %119 = vmatpush1.msra.mxu0 0.0
    %120 = vmatprep.subr.mxu0 0.0
    %121 = vmatpush1.msra.mxu0 0.0
    %122 = vmatprep.subr.mxu0 0.0
    %123 = vmatpush1.msra.mxu0 0.0
    %124 = vmatprep.subr.mxu0 0.0
    %125 = vmatpush1.msra.mxu0 0.0
    %126 = vmatprep.subr.mxu0 0.0
    %127 = vmatpush1.msra.mxu0 0.0
    %128 = vmatprep.subr.mxu0 0.0
    %129 = vmatpush1.msra.mxu0 0.0
    %130 = vmatprep.subr.mxu0 0.0
    %131 = vmatpush1.msra.mxu0 0.0
    %132 = vmatprep.subr.mxu0 0.0
    %133 = vmatpush1.msra.mxu0 0.0
    %134 = vmatprep.subr.mxu0 0.0
    %135 = vmatpush1.msra.mxu0 0.0
    %136 = vmatprep.subr.mxu0 0.0
    %137 = vmatpush1.msra.mxu0 0.0
    %138 = vmatprep.subr.mxu0 0.0
    %139 = vmatpush1.msra.mxu0 0.0
    %140 = vmatprep.subr.mxu0 0.0
    %141 = vmatpush1.msra.mxu0 0.0
    %142 = vmatprep.subr.mxu0 0.0
    %143 = vmatpush1.msra.mxu0 0.0
    %144 = vmatprep.subr.mxu0 0.0
    %145 = vmatpush1.msra.mxu0 0.0
    %146 = vmatprep.subr.mxu0 0.0
    %147 = vmatpush1.msra.mxu0 0.0
    %148 = vmatprep.subr.mxu0 0.0
    %149 = vmatpush1.msra.mxu0 0.0
    %150 = vmatprep.subr.mxu0 0.0
    %151 = vmatpush1.msra.mxu0 0.0
    %152 = vmatprep.subr.mxu0 0.0
    %153 = vmatpush1.msra.mxu0 0.0
    %154 = vmatprep.subr.mxu0 0.0
    %155 = vmatpush1.msra.mxu0 0.0
    %156 = vmatprep.subr.mxu0 0.0
    %157 = vmatpush1.msra.mxu0 0.0
    %158 = vmatprep.subr.mxu0 0.0
    %159 = vmatpush1.msra.mxu0 0.0
    %160 = vmatprep.subr.mxu0 0.0
    %161 = vmatpush1.msra.mxu0 0.0
    %162 = vmatprep.subr.mxu0 0.0
    %163 = vmatpush1.msra.mxu0 0.0
    %164 = vmatprep.subr.mxu0 0.0
    %165 = vmatpush1.msra.mxu0 0.0
    %166 = vmatprep.subr.mxu0 0.0
    %167 = vmatpush1.msra.mxu0 0.0
    %168 = vmatprep.subr.mxu0 0.0
    %169 = vmatpush1.msra.mxu0 0.0
    %170 = vmatprep.subr.mxu0 0.0
    %171 = vmatpush1.msra.mxu0 0.0
    %172 = vmatprep.subr.mxu0 0.0
    %173 = vmatpush1.msra.mxu0 0.0
    %174 = vmatprep.subr.mxu0 0.0
    %175 = vmatpush1.msra.mxu0 0.0
    %176 = vmatprep.mubr.f32.mxu0 0.0
    %177 = vmatmul.mubr.f32.gmra.mrb[0].mxu0 %v89
    %v178 = vpop.f32.mrb[0].mxu0
    %v179 = vadd.f32 %v50, %v178
    %v180 = vpop.f32.mrb[0].mxu0
    %v181 = vadd.f32 %v50, %v180
    %182 = vmatprep.mubr.f32.mxu0 0.0
    %183 = vmatmul.mubr.f32.gmra.mrb[0].mxu0 %v92
    %v184 = vpop.f32.mrb[0].mxu0
    %v185 = vadd.f32 %v55, %v184
    %v186 = vpop.f32.mrb[0].mxu0
    %v187 = vadd.f32 %v55, %v186
    %188 = vmatprep.mubr.f32.mxu0 0.0
    %189 = vmatmul.mubr.f32.gmra.mrb[0].mxu0 %v95
    %v190 = vpop.f32.mrb[0].mxu0
    %v191 = vadd.f32 %v60, %v190
    %v192 = vpop.f32.mrb[0].mxu0
    %v193 = vadd.f32 %v60, %v192
    %194 = vmatprep.mubr.f32.mxu0 0.0
    %195 = vmatmul.mubr.f32.gmra.mrb[0].mxu0 %v98
    %v196 = vpop.f32.mrb[0].mxu0
    %v197 = vadd.f32 %v65, %v196
    %v198 = vpop.f32.mrb[0].mxu0
    %v199 = vadd.f32 %v65, %v198
    %200 = vmatprep.mubr.f32.mxu0 0.0
    %201 = vmatmul.mubr.f32.gmra.mrb[0].mxu0 %v101
    %v202 = vpop.f32.mrb[0].mxu0
    %v203 = vadd.f32 %v70, %v202
    %v204 = vpop.f32.mrb[0].mxu0
    %v205 = vadd.f32 %v70, %v204
    %206 = vmatprep.mubr.f32.mxu0 0.0
    %207 = vmatmul.mubr.f32.gmra.mrb[0].mxu0 %v104
    %v208 = vpop.f32.mrb[0].mxu0
    %v209 = vadd.f32 %v75, %v208
    %v210 = vpop.f32.mrb[0].mxu0
    %v211 = vadd.f32 %v75, %v210
    %212 = vmatprep.mubr.f32.mxu0 0.0
    %213 = vmatmul.mubr.f32.gmra.mrb[0].mxu0 %v107
    %v214 = vpop.f32.mrb[0].mxu0
    %v215 = vadd.f32 %v80, %v214
    %v216 = vpop.f32.mrb[0].mxu0
    %v217 = vadd.f32 %v80, %v216
    %218 = vmatprep.mubr.f32.mxu0 0.0
    %219 = vmatmul.mubr.f32.gmra.mrb[0].mxu0 %v110
    %v220 = vpop.f32.mrb[0].mxu0
    %v221 = vadd.f32 %v85, %v220
    %v222 = vpop.f32.mrb[0].mxu0
    %v223 = vadd.f32 %v85, %v222
    %224 = vdwg.mxu0
    %v225 = vmax.f32 %v179, 0.0
    %v226 = vmax.f32 %v181, 0.0
    %v227 = vmax.f32 %v185, 0.0
    %v228 = vmax.f32 %v187, 0.0
    %v229 = vmax.f32 %v191, 0.0
    %v230 = vmax.f32 %v193, 0.0
    %v231 = vmax.f32 %v197, 0.0
    %v232 = vmax.f32 %v199, 0.0
    %v233 = vmax.f32 %v203, 0.0
    %v234 = vmax.f32 %v205, 0.0
    %v235 = vmax.f32 %v209, 0.0
    %v236 = vmax.f32 %v211, 0.0
    %v237 = vmax.f32 %v215, 0.0
    %v238 = vmax.f32 %v217, 0.0
    %v239 = vmax.f32 %v221, 0.0
    %v240 = vmax.f32 %v223, 0.0
    %v241 = vld [vmem:[%s3] sm:$0xff]
    %v242 = vld [vmem:[%s3 + $0x8] sm:$0xff]
    %v243 = vld [vmem:[%s3 + $0x10] sm:$0xff]
    %v244 = vld [vmem:[%s3 + $0x18] sm:$0xff]
    %v245 = vld [vmem:[%s4] sm:$0xff]
    %v246 = vld [vmem:[%s4 + $0x8] sm:$0xff]
    %v247 = vld [vmem:[%s4 + $0x10] sm:$0xff]
    %v248 = vld [vmem:[%s4 + $0x18] sm:$0xff]
    %250 = vset.pattern.permute.xlu0 0
    %251 = vperm.xlu0 %250, %v245
    %v252 = vpop.permute.xlu0 %251
    %255 = vset.pattern.permute.xlu0 0
    %256 = vperm.xlu0 %255, %v246
    %v257 = vpop.permute.xlu0 %256
    %260 = vset.pattern.permute.xlu0 0
    %261 = vperm.xlu0 %260, %v247
    %v262 = vpop.permute.xlu0 %261
    %265 = vset.pattern.permute.xlu0 0
    %266 = vperm.xlu0 %265, %v248
    %v267 = vpop.permute.xlu0 %266
    %vm269 = vcmask 523264
    %v271 = vsel %vm269, %v241, 0
    %v274 = vsel %vm269, %v242, 0
    %v277 = vsel %vm269, %v243, 0
    %v280 = vsel %vm269, %v244, 0
    %282 = vmatprep.subr.mxu0 %v226
    %283 = vmatpush1.msra.mxu0 %v225
    %284 = vmatprep.subr.mxu0 %v228
    %285 = vmatpush1.msra.mxu0 %v227
    %286 = vmatprep.subr.mxu0 %v230
    %287 = vmatpush1.msra.mxu0 %v229
    %288 = vmatprep.subr.mxu0 %v232
    %289 = vmatpush1.msra.mxu0 %v231
    %290 = vmatprep.subr.mxu0 %v234
    %291 = vmatpush1.msra.mxu0 %v233
    %292 = vmatprep.subr.mxu0 %v236
    %293 = vmatpush1.msra.mxu0 %v235
    %294 = vmatprep.subr.mxu0 %v238
    %295 = vmatpush1.msra.mxu0 %v237
    %296 = vmatprep.subr.mxu0 %v240
    %297 = vmatpush1.msra.mxu0 %v239
    %298 = vmatprep.subr.mxu0 0.0
    %299 = vmatpush1.msra.mxu0 0.0
    %300 = vmatprep.subr.mxu0 0.0
    %301 = vmatpush1.msra.mxu0 0.0
    %302 = vmatprep.subr.mxu0 0.0
    %303 = vmatpush1.msra.mxu0 0.0
    %304 = vmatprep.subr.mxu0 0.0
    %305 = vmatpush1.msra.mxu0 0.0
    %306 = vmatprep.subr.mxu0 0.0
    %307 = vmatpush1.msra.mxu0 0.0
    %308 = vmatprep.subr.mxu0 0.0
    %309 = vmatpush1.msra.mxu0 0.0
    %310 = vmatprep.subr.mxu0 0.0
    %311 = vmatpush1.msra.mxu0 0.0
    %312 = vmatprep.subr.mxu0 0.0
    %313 = vmatpush1.msra.mxu0 0.0
    %314 = vmatprep.subr.mxu0 0.0
    %315 = vmatpush1.msra.mxu0 0.0
    %316 = vmatprep.subr.mxu0 0.0
    %317 = vmatpush1.msra.mxu0 0.0
    %318 = vmatprep.subr.mxu0 0.0
    %319 = vmatpush1.msra.mxu0 0.0
    %320 = vmatprep.subr.mxu0 0.0
    %321 = vmatpush1.msra.mxu0 0.0
    %322 = vmatprep.subr.mxu0 0.0
    %323 = vmatpush1.msra.mxu0 0.0
    %324 = vmatprep.subr.mxu0 0.0
    %325 = vmatpush1.msra.mxu0 0.0
    %326 = vmatprep.subr.mxu0 0.0
    %327 = vmatpush1.msra.mxu0 0.0
    %328 = vmatprep.subr.mxu0 0.0
    %329 = vmatpush1.msra.mxu0 0.0
    %330 = vmatprep.subr.mxu0 0.0
    %331 = vmatpush1.msra.mxu0 0.0
    %332 = vmatprep.subr.mxu0 0.0
    %333 = vmatpush1.msra.mxu0 0.0
    %334 = vmatprep.subr.mxu0 0.0
    %335 = vmatpush1.msra.mxu0 0.0
    %336 = vmatprep.subr.mxu0 0.0
    %337 = vmatpush1.msra.mxu0 0.0
    %338 = vmatprep.subr.mxu0 0.0
    %339 = vmatpush1.msra.mxu0 0.0
    %340 = vmatprep.subr.mxu0 0.0
    %341 = vmatpush1.msra.mxu0 0.0
    %342 = vmatprep.subr.mxu0 0.0
    %343 = vmatpush1.msra.mxu0 0.0
    %344 = vmatprep.subr.mxu0 0.0
    %345 = vmatpush1.msra.mxu0 0.0
    %346 = vmatprep.mubr.f32.mxu0 0.0
    %347 = vmatmul.mubr.f32.gmra.mrb[0].mxu0 %v271
    %v348 = vpop.f32.mrb[0].mxu0
    %v349 = vadd.f32 %v252, %v348
    %v350 = vpop.f32.mrb[0].mxu0
    %v351 = vadd.f32 %v252, %v350
    %352 = vmatprep.mubr.f32.mxu0 0.0
    %353 = vmatmul.mubr.f32.gmra.mrb[0].mxu0 %v274
    %v354 = vpop.f32.mrb[0].mxu0
    %v355 = vadd.f32 %v257, %v354
    %v356 = vpop.f32.mrb[0].mxu0
    %v357 = vadd.f32 %v257, %v356
    %358 = vmatprep.mubr.f32.mxu0 0.0
    %359 = vmatmul.mubr.f32.gmra.mrb[0].mxu0 %v277
    %v360 = vpop.f32.mrb[0].mxu0
    %v361 = vadd.f32 %v262, %v360
    %v362 = vpop.f32.mrb[0].mxu0
    %v363 = vadd.f32 %v262, %v362
    %364 = vmatprep.mubr.f32.mxu0 0.0
    %365 = vmatmul.mubr.f32.gmra.mrb[0].mxu0 %v280
    %v366 = vpop.f32.mrb[0].mxu0
    %v367 = vadd.f32 %v267, %v366
    %v368 = vpop.f32.mrb[0].mxu0
    %v369 = vadd.f32 %v267, %v368
    %370 = vdwg.mxu0
    %v371 = vmax.f32 %v349, 0.0
    %v372 = vmax.f32 %v351, 0.0
    %v373 = vmax.f32 %v355, 0.0
    %v374 = vmax.f32 %v357, 0.0
    %v375 = vmax.f32 %v361, 0.0
    %v376 = vmax.f32 %v363, 0.0
    %v377 = vmax.f32 %v367, 0.0
    %v378 = vmax.f32 %v369, 0.0
    %v379 = vld [vmem:[%s5] sm:$0xf]
    %v380 = vld [vmem:[%s6] sm:$0xf]
    %382 = vset.pattern.permute.xlu0 0
    %383 = vperm.xlu0 %382, %v380
    %v384 = vpop.permute.xlu0 %383
    %vm386 = vcmask 261120
    %v388 = vsel %vm386, %v379, 0
    %390 = vmatprep.subr.mxu0 %v372
    %391 = vmatpush1.msra.mxu0 %v371
    %392 = vmatprep.subr.mxu0 %v374
    %393 = vmatpush1.msra.mxu0 %v373
    %394 = vmatprep.subr.mxu0 %v376
    %395 = vmatpush1.msra.mxu0 %v375
    %396 = vmatprep.subr.mxu0 %v378
    %397 = vmatpush1.msra.mxu0 %v377
    %398 = vmatprep.subr.mxu0 0.0
    %399 = vmatpush1.msra.mxu0 0.0
    %400 = vmatprep.subr.mxu0 0.0
    %401 = vmatpush1.msra.mxu0 0.0
    %402 = vmatprep.subr.mxu0 0.0
    %403 = vmatpush1.msra.mxu0 0.0
    %404 = vmatprep.subr.mxu0 0.0
    %405 = vmatpush1.msra.mxu0 0.0
    %406 = vmatprep.subr.mxu0 0.0
    %407 = vmatpush1.msra.mxu0 0.0
    %408 = vmatprep.subr.mxu0 0.0
    %409 = vmatpush1.msra.mxu0 0.0
    %410 = vmatprep.subr.mxu0 0.0
    %411 = vmatpush1.msra.mxu0 0.0
    %412 = vmatprep.subr.mxu0 0.0
    %413 = vmatpush1.msra.mxu0 0.0
    %414 = vmatprep.subr.mxu0 0.0
    %415 = vmatpush1.msra.mxu0 0.0
    %416 = vmatprep.subr.mxu0 0.0
    %417 = vmatpush1.msra.mxu0 0.0
    %418 = vmatprep.subr.mxu0 0.0
    %419 = vmatpush1.msra.mxu0 0.0
    %420 = vmatprep.subr.mxu0 0.0
    %421 = vmatpush1.msra.mxu0 0.0
    %422 = vmatprep.subr.mxu0 0.0
    %423 = vmatpush1.msra.mxu0 0.0
    %424 = vmatprep.subr.mxu0 0.0
    %425 = vmatpush1.msra.mxu0 0.0
    %426 = vmatprep.subr.mxu0 0.0
    %427 = vmatpush1.msra.mxu0 0.0
    %428 = vmatprep.subr.mxu0 0.0
    %429 = vmatpush1.msra.mxu0 0.0
    %430 = vmatprep.subr.mxu0 0.0
    %431 = vmatpush1.msra.mxu0 0.0
    %432 = vmatprep.subr.mxu0 0.0
    %433 = vmatpush1.msra.mxu0 0.0
    %434 = vmatprep.subr.mxu0 0.0
    %435 = vmatpush1.msra.mxu0 0.0
    %436 = vmatprep.subr.mxu0 0.0
    %437 = vmatpush1.msra.mxu0 0.0
    %438 = vmatprep.subr.mxu0 0.0
    %439 = vmatpush1.msra.mxu0 0.0
    %440 = vmatprep.subr.mxu0 0.0
    %441 = vmatpush1.msra.mxu0 0.0
    %442 = vmatprep.subr.mxu0 0.0
    %443 = vmatpush1.msra.mxu0 0.0
    %444 = vmatprep.subr.mxu0 0.0
    %445 = vmatpush1.msra.mxu0 0.0
    %446 = vmatprep.subr.mxu0 0.0
    %447 = vmatpush1.msra.mxu0 0.0
    %448 = vmatprep.subr.mxu0 0.0
    %449 = vmatpush1.msra.mxu0 0.0
    %450 = vmatprep.subr.mxu0 0.0
    %451 = vmatpush1.msra.mxu0 0.0
    %452 = vmatprep.subr.mxu0 0.0
    %453 = vmatpush1.msra.mxu0 0.0
    %454 = vmatprep.mubr.f32.mxu0 0.0
    %455 = vmatmul.mubr.f32.gmra.mrb[0].mxu0 %v388
    %v456 = vpop.f32.mrb[0].mxu0
    %v457 = vadd.f32 %v384, %v456
    %v458 = vpop.f32.mrb[0].mxu0
    %v459 = vadd.f32 %v384, %v458
    %460 = vdwg.mxu0
    %v463 = vcombine.low %v457, %v459
    %465 = vst [vmem:[#allocation2] sm:$0xff] %v463
    // Predicated region
    $region30: #{tpu_custom_call.1} parent=1 // pred_check
      _
    $region31: #{tpu_custom_call.1} parent=1 // pred_check_branch
      %467 = sbr.rel (0) target = $region33
    $region32: #{tpu_custom_call.1} parent=1 // pred_region
      %s469 = ssub.s32 128, 128
      %470 = vsyncadd [#allocation3], %s469
      %s472 = sshll.u32 [#allocation2], 4
      %s473 = int_to_ptr.vmem [resolvable:$true] %s472
      %475 = dma.vmem_to_hbm [thread:$0]  %s473, 128, %s7, [#allocation3]
    $region33: #{tpu_custom_call.1} parent=1 // pred_fallthru
      _
    // Predicated region
    $region34: #{tpu_custom_call.1} parent=1 // pred_check
      _
    $region35: #{tpu_custom_call.1} parent=1 // pred_check_branch
      %477 = sbr.rel (0) target = $region37
    $region36: #{tpu_custom_call.1} parent=1 // pred_region
      %478 = dma.done [#allocation3], 128
    $region37: #{tpu_custom_call.1} parent=1 // pred_fallthru
      _
    %479 = vsyncpa [#allocation3], 1

</llo_original>
